<compile_context>
chip_gen: v5e
topology: v5e:2x2
jax: 0.10.0
libtpu: 0.0.40
codegen_flags: <defaults>
</compile_context>

<pallas_src>
import functools

import jax
import jax.numpy as jnp
from jax.experimental import pallas as pl
from jax.experimental.pallas import tpu as pltpu


_TARGET_TILE_BYTES = 2 * 1024 * 1024   # per policy-tile VMEM budget (before 2x buffering)
_NUM_CORE_SPLITS = 2                   # leading "parallel" axis (v7x megacore); cheap on 1-TC
_MIN_PALLAS_ELEMS = 16 * 1024          # below this, pallas_call overhead dominates


def _round_up(x, m):
    return (x + m - 1) // m * m


def _reinforce_partial_kernel(policy_ref, action_ref, reward_ref,
                              ent_out_ref, rl_out_ref,
                              ent_acc_ref, rl_acc_ref,
                              *, batch_rows, steps_per_core, needs_mask):
    """Accumulates sum(p*log p) and sum(p[i,a_i]*r_i) for this core's batch chunk."""
    c = pl.program_id(0)          # core-split index ("parallel")
    i = pl.program_id(1)          # batch-tile index within this core ("arbitrary")

    @pl.when(i == 0)
    def _init():
        ent_acc_ref[...] = jnp.zeros_like(ent_acc_ref)
        rl_acc_ref[...] = jnp.zeros_like(rl_acc_ref)

    p = policy_ref[...].astype(jnp.float32)      # (TB, C), cast from native dtype per-tile
    a = action_ref[...]                          # (TB, 1) int32
    r = reward_ref[...].astype(jnp.float32)      # (TB, 1) f32
    tb = p.shape[0]

    # one-hot(action) via lane iota compare -> no cross-lane gather
    col = jax.lax.broadcasted_iota(jnp.int32, p.shape, 1)
    onehot = col == a                                          # (TB, C) bool

    # xlogy-style guard: p == 0 contributes 0 (strictly-positive policy assumed).
    plogp = jnp.where(p > 0, p * jnp.log(jnp.where(p > 0, p, 1.0)), 0.0)
    rl_term = jnp.where(onehot, p * r, 0.0)                    # p[i,a_i]*r_i at the hot lane

    if needs_mask:
        # Mask rows past the real batch (partial last tile / clamped duplicate tiles).
        tile_idx = c * steps_per_core + i
        row = jax.lax.broadcasted_iota(jnp.int32, (tb, 1), 0)
        valid = (tile_idx * tb + row) < batch_rows
        plogp = jnp.where(valid, plogp, 0.0)
        rl_term = jnp.where(valid, rl_term, 0.0)

    # Pure element-wise accumulation (VPU); defer the XLU reduce to finalize.
    ent_acc_ref[...] += plogp
    rl_acc_ref[...] += rl_term

    @pl.when(i == pl.num_programs(1) - 1)
    def _finalize():
        # Single cross-lane/sublane reduce per core chunk; write lane-dense slabs.
        ent_out_ref[...] = jnp.zeros_like(ent_out_ref) + jnp.sum(ent_acc_ref[...])
        rl_out_ref[...] = jnp.zeros_like(rl_out_ref) + jnp.sum(rl_acc_ref[...])


def _reinforce_loss_pallas(policy, action, discount_reward, entropy_beta):
    B, C = policy.shape
    action2d = action.astype(jnp.int32).reshape(B, 1)
    reward2d = discount_reward.astype(jnp.float32).reshape(B, 1)

    # Pad tiny batches up to the 8-row sublane granularity (zero rows contribute 0).
    b_arr = B
    if B < 8:
        pad = 8 - B
        policy = jnp.pad(policy, ((0, pad), (0, 0)))
        action2d = jnp.pad(action2d, ((0, pad), (0, 0)))
        reward2d = jnp.pad(reward2d, ((0, pad), (0, 0)))
        b_arr = 8

    # Tile height: ~2 MiB of (lane-padded) VMEM per policy buffer, multiple of 8,
    # never taller than the (8-floored) batch.  Keeps double-buffered tiles +
    # two f32 accumulators ~8 MiB total -> fits v7x's 64 MiB VMEM comfortably.
    c_pad = _round_up(C, 128)
    rows = _TARGET_TILE_BYTES // (c_pad * 4)
    tb = max(8, (rows // 8) * 8)
    tb = min(tb, max(8, (b_arr // 8) * 8))

    num_tiles = pl.cdiv(b_arr, tb)
    ncore = min(_NUM_CORE_SPLITS, num_tiles)
    spc = pl.cdiv(num_tiles, ncore)                # batch-tiles per core
    needs_mask = (ncore * spc * tb) != b_arr

    def data_map(c, i):
        # Clamp so duplicate tiles on the short core never DMA out of bounds
        # (their rows are masked to zero contribution in-kernel).
        t = jnp.minimum(c * spc + i, num_tiles - 1)
        return (t, 0)

    def out_map(c, i):
        return (c, 0, 0)

    kernel = functools.partial(
        _reinforce_partial_kernel,
        batch_rows=b_arr,
        steps_per_core=spc,
        needs_mask=needs_mask,
    )

    out_shape = [jax.ShapeDtypeStruct((ncore, 8, 128), jnp.float32),
                 jax.ShapeDtypeStruct((ncore, 8, 128), jnp.float32)]

    ent_part, rl_part = pl.pallas_call(
        kernel,
        out_shape=out_shape,
        grid_spec=pltpu.PrefetchScalarGridSpec(
            num_scalar_prefetch=0,
            grid=(ncore, spc),
            in_specs=[
                pl.BlockSpec((tb, C), data_map),     # policy tile (native dtype)
                pl.BlockSpec((tb, 1), data_map),     # action tile
                pl.BlockSpec((tb, 1), data_map),     # reward tile
            ],
            out_specs=[
                pl.BlockSpec((1, 8, 128), out_map),  # per-core sum(p*log p)
                pl.BlockSpec((1, 8, 128), out_map),  # per-core sum(p[i,a_i]*r_i)
            ],
            scratch_shapes=[
                pltpu.VMEM((tb, C), jnp.float32),    # entropy accumulator
                pltpu.VMEM((tb, C), jnp.float32),    # reinforce accumulator
            ],
        ),
        compiler_params=pltpu.CompilerParams(
            dimension_semantics=("parallel", "arbitrary"),
            vmem_limit_bytes=32 * 1024 * 1024,
        ),
    )(policy, action2d, reward2d)

    # Combine per-core partial sums; final scalar math (mean, beta) is negligible.
    sum_plogp = jnp.sum(ent_part[:, 0, 0])
    sum_rl = jnp.sum(rl_part[:, 0, 0])
    inv_b = jnp.float32(1.0 / B)
    entropy = -sum_plogp * inv_b
    reinforce = -sum_rl * inv_b

    monitors = {}
    if entropy_beta is not None:
        beta = jnp.float32(entropy_beta)
        monitors['reinforce_loss'] = reinforce
        monitors['entropy_loss'] = -entropy * beta
        loss = reinforce - entropy * beta
    else:
        loss = reinforce
    monitors['entropy'] = entropy
    return loss, monitors


def _reinforce_loss_ref(policy, action, discount_reward, entropy_beta=None):
    """Pure-JAX reference / fast path for tiny shapes (same math as PyTorch)."""
    p = policy.astype(jnp.float32)
    r = discount_reward.astype(jnp.float32)
    entropy = -(p * jnp.log(p)).sum(axis=1).mean()
    nll = -jnp.take_along_axis(p, action.astype(jnp.int32)[:, None], axis=1)[:, 0]
    loss = (nll * r).mean()
    monitors = {}
    if entropy_beta is not None:
        monitors['reinforce_loss'] = loss
        monitors['entropy_loss'] = -entropy * jnp.float32(entropy_beta)
        loss = loss - entropy * jnp.float32(entropy_beta)
    monitors['entropy'] = entropy
    return loss, monitors


def reinforce_loss(policy, action, discount_reward, entropy_beta=None,
                   use_pallas=None):
    """REINFORCELoss.forward.

    Args:
      policy:          (B, C) float32 or bfloat16 action probabilities (> 0).
      action:          (B,)   integer chosen actions.
      discount_reward: (B,)   float discounted returns.
      entropy_beta:    optional python float.
      use_pallas:      None -> auto (Pallas only when B*C is large enough to be
                       HBM-bound); True/False to force a path.

    Returns:
      (loss, monitors) matching the PyTorch module.
    """
    B, C = policy.shape
    if use_pallas is None:
        use_pallas = (B * C) >= _MIN_PALLAS_ELEMS
    if not use_pallas:
        return _reinforce_loss_ref(policy, action, discount_reward, entropy_beta)
    return _reinforce_loss_pallas(policy, action, discount_reward, entropy_beta)


if __name__ == "__main__":
    key = jax.random.PRNGKey(0)
    k_logits, k_action, k_reward = jax.random.split(key, 3)

    B, C = 100, 16   # small; B not a multiple of the tile -> exercises masking

    logits = jax.random.normal(k_logits, (B, C), dtype=jnp.float32)
    policy = jax.nn.softmax(logits, axis=-1)            # strictly positive probs
    action = jax.random.randint(k_action, (B,), 0, C, dtype=jnp.int32)
    discount_reward = jax.random.normal(k_reward, (B,), dtype=jnp.float32)

    entropy_beta = 0.1

    # Force the Pallas path (auto-dispatch would use plain jnp at this tiny size).
    loss, monitors = reinforce_loss(policy, action, discount_reward,
                                    entropy_beta=entropy_beta, use_pallas=True)
    jax.block_until_ready(loss)
    for v in monitors.values():
        jax.block_until_ready(v)

    ref_loss, ref_mon = _reinforce_loss_ref(policy, action, discount_reward,
                                            entropy_beta)
    assert jnp.allclose(loss, ref_loss, atol=1e-5, rtol=1e-5)
    for name in ('reinforce_loss', 'entropy_loss', 'entropy'):
        assert jnp.allclose(monitors[name], ref_mon[name], atol=1e-5, rtol=1e-5), name

    # entropy_beta=None branch (loss == reinforce loss, only 'entropy' monitored).
    loss_nb, mon_nb = reinforce_loss(policy, action, discount_reward,
                                     entropy_beta=None, use_pallas=True)
    ref_loss_nb, ref_mon_nb = _reinforce_loss_ref(policy, action, discount_reward, None)
    jax.block_until_ready(loss_nb)
    assert set(mon_nb.keys()) == {'entropy'}
    assert jnp.allclose(loss_nb, ref_loss_nb, atol=1e-5, rtol=1e-5)
    assert jnp.allclose(mon_nb['entropy'], ref_mon_nb['entropy'], atol=1e-5, rtol=1e-5)

    # bf16 policy path: kernel reads bf16 from HBM and casts per-tile to f32.
    policy_bf16 = policy.astype(jnp.bfloat16)
    loss_bf, _ = reinforce_loss(policy_bf16, action, discount_reward,
                                entropy_beta=entropy_beta, use_pallas=True)
    jax.block_until_ready(loss_bf)
    ref_loss_bf, _ = _reinforce_loss_ref(policy_bf16.astype(jnp.float32), action,
                                         discount_reward, entropy_beta)
    assert jnp.allclose(loss_bf, ref_loss_bf, atol=1e-4, rtol=1e-4)

    # Auto-dispatch sanity check (tiny shape -> plain-JAX fast path).
    loss_auto, _ = reinforce_loss(policy, action, discount_reward,
                                  entropy_beta=entropy_beta)
    assert jnp.allclose(loss_auto, ref_loss, atol=1e-5, rtol=1e-5)

    print("KERNEL_OK")
</pallas_src>

<mosaic_0001>
module attributes {stable_mosaic.version = 11 : i64} {
  func.func @_reinforce_partial_kernel(%arg0: i32, %arg1: i32, %arg2: memref<96x16xf32, #tpu.memory_space<vmem>>, %arg3: memref<96x1xi32, #tpu.memory_space<vmem>>, %arg4: memref<96x1xf32, #tpu.memory_space<vmem>>, %arg5: memref<1x8x128xf32, #tpu.memory_space<vmem>>, %arg6: memref<1x8x128xf32, #tpu.memory_space<vmem>>, %arg7: memref<96x16xf32, #tpu.memory_space<vmem>>, %arg8: memref<96x16xf32, #tpu.memory_space<vmem>>) attributes {dimension_semantics = [#tpu.dimension_semantics<parallel>, #tpu.dimension_semantics<arbitrary>], iteration_bounds = array<i64: 2, 1>, scalar_prefetch = 0 : i64, scratch_operands = 2 : i64, tpu.core_type = #tpu.core_type<tc>, window_params = [{transform_indices = @transform_0, window_bounds = array<i64: 96, 16>}, {transform_indices = @transform_1, window_bounds = array<i64: 96, 1>}, {transform_indices = @transform_2, window_bounds = array<i64: 96, 1>}, {transform_indices = @transform_3, window_bounds = array<i64: 1, 8, 128>}, {transform_indices = @transform_4, window_bounds = array<i64: 1, 8, 128>}]} {
    %c0_i32 = arith.constant 0 : i32
    %0 = arith.cmpi eq, %arg1, %c0_i32 : i32
    %1 = arith.extui %0 : i1 to i32
    %c0_i32_0 = arith.constant 0 : i32
    %2 = arith.cmpi ne, %1, %c0_i32_0 : i32
    scf.if %2 {
      %cst_22 = arith.constant 0.000000e+00 : f32
      %48 = vector.broadcast %cst_22 : f32 to vector<96x16xf32>
      %c0_23 = arith.constant 0 : index
      %c0_24 = arith.constant 0 : index
      %49 = vector.load %arg7[%c0_23, %c0_24] : memref<96x16xf32, #tpu.memory_space<vmem>>, vector<96x16xf32>
      tpu.vector_store %arg7[%c0_23, %c0_24], %48 {strides = array<i32>} : memref<96x16xf32, #tpu.memory_space<vmem>>, vector<96x16xf32>,
      %cst_25 = arith.constant 0.000000e+00 : f32
      %50 = vector.broadcast %cst_25 : f32 to vector<96x16xf32>
      %c0_26 = arith.constant 0 : index
      %c0_27 = arith.constant 0 : index
      %51 = vector.load %arg8[%c0_26, %c0_27] : memref<96x16xf32, #tpu.memory_space<vmem>>, vector<96x16xf32>
      tpu.vector_store %arg8[%c0_26, %c0_27], %50 {strides = array<i32>} : memref<96x16xf32, #tpu.memory_space<vmem>>, vector<96x16xf32>,
    } else {
    }
    %c0 = arith.constant 0 : index
    %c0_1 = arith.constant 0 : index
    %3 = vector.load %arg2[%c0, %c0_1] : memref<96x16xf32, #tpu.memory_space<vmem>>, vector<96x16xf32>
    %c0_2 = arith.constant 0 : index
    %c0_3 = arith.constant 0 : index
    %4 = vector.load %arg3[%c0_2, %c0_3] : memref<96x1xi32, #tpu.memory_space<vmem>>, vector<96x1xi32>
    %c0_4 = arith.constant 0 : index
    %c0_5 = arith.constant 0 : index
    %5 = vector.load %arg4[%c0_4, %c0_5] : memref<96x1xf32, #tpu.memory_space<vmem>>, vector<96x1xf32>
    %6 = tpu.iota {dimensions = array<i32: 1>} : vector<96x16xi32>
    %7 = vector.broadcast %4 : vector<96x1xi32> to vector<96x16xi32>
    %8 = arith.cmpi eq, %6, %7 : vector<96x16xi32>
    %cst = arith.constant 0.000000e+00 : f32
    %9 = vector.broadcast %cst : f32 to vector<96x16xf32>
    %10 = arith.cmpf ogt, %3, %9 : vector<96x16xf32>
    %cst_6 = arith.constant 0.000000e+00 : f32
    %11 = vector.broadcast %cst_6 : f32 to vector<96x16xf32>
    %12 = arith.cmpf ogt, %3, %11 : vector<96x16xf32>
    %cst_7 = arith.constant 1.000000e+00 : f32
    %13 = vector.broadcast %cst_7 : f32 to vector<96x16xf32>
    %14 = arith.select %12, %3, %13 : vector<96x16xi1>, vector<96x16xf32>
    %15 = math.log %14 : vector<96x16xf32>
    %16 = arith.mulf %3, %15 : vector<96x16xf32>
    %cst_8 = arith.constant 0.000000e+00 : f32
    %17 = vector.broadcast %cst_8 : f32 to vector<96x16xf32>
    %18 = arith.select %10, %16, %17 : vector<96x16xi1>, vector<96x16xf32>
    %19 = vector.broadcast %5 : vector<96x1xf32> to vector<96x16xf32>
    %20 = arith.mulf %3, %19 : vector<96x16xf32>
    %cst_9 = arith.constant 0.000000e+00 : f32
    %21 = vector.broadcast %cst_9 : f32 to vector<96x16xf32>
    %22 = arith.select %8, %20, %21 : vector<96x16xi1>, vector<96x16xf32>
    %c1_i32 = arith.constant 1 : i32
    %23 = arith.muli %arg0, %c1_i32 : i32
    %24 = arith.addi %23, %arg1 : i32
    %25 = tpu.iota {dimensions = array<i32: 0>} : vector<96x1xi32>
    %c96_i32 = arith.constant 96 : i32
    %26 = arith.muli %24, %c96_i32 : i32
    %27 = vector.broadcast %26 : i32 to vector<96x1xi32>
    %28 = arith.addi %27, %25 : vector<96x1xi32>
    %c100_i32 = arith.constant 100 : i32
    %29 = vector.broadcast %c100_i32 : i32 to vector<96x1xi32>
    %30 = arith.cmpi slt, %28, %29 : vector<96x1xi32>
    %cst_10 = arith.constant 0.000000e+00 : f32
    %31 = vector.shape_cast %30 : vector<96x1xi1> to vector<96x1xi1>
    %32 = vector.broadcast %31 : vector<96x1xi1> to vector<96x16xi1>
    %33 = vector.broadcast %cst_10 : f32 to vector<96x16xf32>
    %34 = arith.select %32, %18, %33 : vector<96x16xi1>, vector<96x16xf32>
    %cst_11 = arith.constant 0.000000e+00 : f32
    %35 = vector.shape_cast %30 : vector<96x1xi1> to vector<96x1xi1>
    %36 = vector.broadcast %35 : vector<96x1xi1> to vector<96x16xi1>
    %37 = vector.broadcast %cst_11 : f32 to vector<96x16xf32>
    %38 = arith.select %36, %22, %37 : vector<96x16xi1>, vector<96x16xf32>
    %c0_12 = arith.constant 0 : index
    %c0_13 = arith.constant 0 : index
    %39 = vector.load %arg7[%c0_12, %c0_13] : memref<96x16xf32, #tpu.memory_space<vmem>>, vector<96x16xf32>
    %40 = arith.addf %39, %34 : vector<96x16xf32>
    %c0_14 = arith.constant 0 : index
    %c0_15 = arith.constant 0 : index
    %41 = vector.load %arg7[%c0_14, %c0_15] : memref<96x16xf32, #tpu.memory_space<vmem>>, vector<96x16xf32>
    tpu.vector_store %arg7[%c0_14, %c0_15], %40 {strides = array<i32>} : memref<96x16xf32, #tpu.memory_space<vmem>>, vector<96x16xf32>,
    %c0_16 = arith.constant 0 : index
    %c0_17 = arith.constant 0 : index
    %42 = vector.load %arg8[%c0_16, %c0_17] : memref<96x16xf32, #tpu.memory_space<vmem>>, vector<96x16xf32>
    %43 = arith.addf %42, %38 : vector<96x16xf32>
    %c0_18 = arith.constant 0 : index
    %c0_19 = arith.constant 0 : index
    %44 = vector.load %arg8[%c0_18, %c0_19] : memref<96x16xf32, #tpu.memory_space<vmem>>, vector<96x16xf32>
    tpu.vector_store %arg8[%c0_18, %c0_19], %43 {strides = array<i32>} : memref<96x16xf32, #tpu.memory_space<vmem>>, vector<96x16xf32>,
    %c0_i32_20 = arith.constant 0 : i32
    %45 = arith.cmpi eq, %arg1, %c0_i32_20 : i32
    %46 = arith.extui %45 : i1 to i32
    %c0_i32_21 = arith.constant 0 : i32
    %47 = arith.cmpi ne, %46, %c0_i32_21 : i32
    scf.if %47 {
      %cst_22 = arith.constant 0.000000e+00 : f32
      %48 = vector.broadcast %cst_22 : f32 to vector<1x8x128xf32>
      %c0_23 = arith.constant 0 : index
      %c0_24 = arith.constant 0 : index
      %49 = vector.load %arg7[%c0_23, %c0_24] : memref<96x16xf32, #tpu.memory_space<vmem>>, vector<96x16xf32>
      %50 = vector.shape_cast %49 : vector<96x16xf32> to vector<1x96x16xf32>
      %cst_25 = arith.constant dense<0.000000e+00> : vector<1xf32>
      %51 = vector.multi_reduction <add>, %50, %cst_25 [1, 2] : vector<1x96x16xf32> to vector<1xf32>
      %52 = vector.shape_cast %51 : vector<1xf32> to vector<1x1x1xf32>
      %53 = vector.extract %52[0, 0, 0] : f32 from vector<1x1x1xf32>
      %54 = vector.broadcast %53 : f32 to vector<1x8x128xf32>
      %55 = arith.addf %48, %54 : vector<1x8x128xf32>
      %c0_26 = arith.constant 0 : index
      %c0_27 = arith.constant 0 : index
      %c0_28 = arith.constant 0 : index
      %56 = vector.load %arg5[%c0_26, %c0_27, %c0_28] : memref<1x8x128xf32, #tpu.memory_space<vmem>>, vector<1x8x128xf32>
      tpu.vector_store %arg5[%c0_26, %c0_27, %c0_28], %55 {strides = array<i32>} : memref<1x8x128xf32, #tpu.memory_space<vmem>>, vector<1x8x128xf32>,
      %cst_29 = arith.constant 0.000000e+00 : f32
      %57 = vector.broadcast %cst_29 : f32 to vector<1x8x128xf32>
      %c0_30 = arith.constant 0 : index
      %c0_31 = arith.constant 0 : index
      %58 = vector.load %arg8[%c0_30, %c0_31] : memref<96x16xf32, #tpu.memory_space<vmem>>, vector<96x16xf32>
      %59 = vector.shape_cast %58 : vector<96x16xf32> to vector<1x96x16xf32>
      %cst_32 = arith.constant dense<0.000000e+00> : vector<1xf32>
      %60 = vector.multi_reduction <add>, %59, %cst_32 [1, 2] : vector<1x96x16xf32> to vector<1xf32>
      %61 = vector.shape_cast %60 : vector<1xf32> to vector<1x1x1xf32>
      %62 = vector.extract %61[0, 0, 0] : f32 from vector<1x1x1xf32>
      %63 = vector.broadcast %62 : f32 to vector<1x8x128xf32>
      %64 = arith.addf %57, %63 : vector<1x8x128xf32>
      %c0_33 = arith.constant 0 : index
      %c0_34 = arith.constant 0 : index
      %c0_35 = arith.constant 0 : index
      %65 = vector.load %arg6[%c0_33, %c0_34, %c0_35] : memref<1x8x128xf32, #tpu.memory_space<vmem>>, vector<1x8x128xf32>
      tpu.vector_store %arg6[%c0_33, %c0_34, %c0_35], %64 {strides = array<i32>} : memref<1x8x128xf32, #tpu.memory_space<vmem>>, vector<1x8x128xf32>,
    } else {
    }
    return
  }
  func.func @transform_0(%arg0: i32, %arg1: i32) -> (i32, i32) {
    %c1_i32 = arith.constant 1 : i32
    %0 = arith.muli %arg0, %c1_i32 : i32
    %1 = arith.addi %0, %arg1 : i32
    %c1_i32_0 = arith.constant 1 : i32
    %2 = arith.minsi %1, %c1_i32_0 : i32
    %c0_i32 = arith.constant 0 : i32
    %c0_i32_1 = arith.constant 0 : i32
    return %2, %c0_i32 : i32, i32
  }
  func.func @transform_1(%arg0: i32, %arg1: i32) -> (i32, i32) {
    %c1_i32 = arith.constant 1 : i32
    %0 = arith.muli %arg0, %c1_i32 : i32
    %1 = arith.addi %0, %arg1 : i32
    %c1_i32_0 = arith.constant 1 : i32
    %2 = arith.minsi %1, %c1_i32_0 : i32
    %c0_i32 = arith.constant 0 : i32
    %c0_i32_1 = arith.constant 0 : i32
    return %2, %c0_i32 : i32, i32
  }
  func.func @transform_2(%arg0: i32, %arg1: i32) -> (i32, i32) {
    %c1_i32 = arith.constant 1 : i32
    %0 = arith.muli %arg0, %c1_i32 : i32
    %1 = arith.addi %0, %arg1 : i32
    %c1_i32_0 = arith.constant 1 : i32
    %2 = arith.minsi %1, %c1_i32_0 : i32
    %c0_i32 = arith.constant 0 : i32
    %c0_i32_1 = arith.constant 0 : i32
    return %2, %c0_i32 : i32, i32
  }
  func.func @transform_3(%arg0: i32, %arg1: i32) -> (i32, i32, i32) {
    %c0_i32 = arith.constant 0 : i32
    %c0_i32_0 = arith.constant 0 : i32
    %c0_i32_1 = arith.constant 0 : i32
    return %arg0, %c0_i32, %c0_i32_0 : i32, i32, i32
  }
  func.func @transform_4(%arg0: i32, %arg1: i32) -> (i32, i32, i32) {
    %c0_i32 = arith.constant 0 : i32
    %c0_i32_0 = arith.constant 0 : i32
    %c0_i32_1 = arith.constant 0 : i32
    return %arg0, %c0_i32, %c0_i32_0 : i32, i32, i32
  }
}

</mosaic_0001>

<llo_original>
// kernel: tpu_custom_call.1
$region0: #{tpu_custom_call.1}
  #allocation0 [shape = 'u32[]', space=smem, size = 0x4, offset = 0x4, fixed_abs, tag = 'smem constant byte address 0x4 - core index']
  #allocation1 [shape = 'u32[72,128]{1,0:T(1,128)}', space=vmem, size = 0x9000, scoped, tag = 'internal scratch']
  #allocation2 [shape = 'f32[96,16]{1,0:T(8,128)}', space=vmem, size = 0xc000, scoped, tag = 'scratch operand']
  #allocation3 [shape = 'f32[96,16]{1,0:T(8,128)}', space=vmem, size = 0xc000, scoped, tag = 'scratch operand']
  %s0 = inlined_call_operand.vmem [shape: f32[100,16], index: 0, kind: input, shape index: {}]
  %s1 = inlined_call_operand.vmem [shape: s32[100,1], index: 1, kind: input, shape index: {}]
  %s2 = inlined_call_operand.vmem [shape: f32[100,1], index: 2, kind: input, shape index: {}]
  %s3 = inlined_call_operand.hbm [shape: f32[2,8,128], index: 3, kind: output, shape index: {0}]
  %s4 = inlined_call_operand.hbm [shape: f32[2,8,128], index: 4, kind: output, shape index: {1}]
  %5 = xla_tuple %s3, %s4
  %s6 = sld [smem:[#allocation0]]
  $region61: #{tpu_custom_call.1} parent=0
    _
  %s8 = ssub.s32 1, %s6
  %s9 = scalar_select 0, %s8, %s6
  $region1: #{tpu_custom_call.1} parent=0
    #allocation4 [shape = 'u8[8192]{0}', space=vmem, size = 0x2000, scoped, tag = 'output window, operand 0']
    #allocation5 [shape = 's32[2]{0}', space=sflag, size = 0x8, scoped, tag = 'scoped memory for tpu_custom_call.1']
    #allocation6 [shape = 'u8[8192]{0}', space=vmem, size = 0x2000, scoped, tag = 'output window, operand 1']
    #allocation7 [shape = 's32[2]{0}', space=sflag, size = 0x8, scoped, tag = 'scoped memory for tpu_custom_call.1']
    %10 = vsyncpa [#allocation5], 0
    %s11 = scalar_lea.sflag [#allocation5], 1
    %12 = vsyncpa %s11, 0
    %13 = vsyncpa [#allocation7], 0
    %s14 = scalar_lea.sflag [#allocation7], 1
    %15 = vsyncpa %s14, 0
    loop: start=0, step=1, limit=4
    $region2: #{tpu_custom_call.1} parent=1 // loop_pre_header
      _
    $region3: #{tpu_custom_call.1} parent=1 // loop_header
      %s17 = sphi 0, %s21
      %p18 = scmp.ge.s32.totalorder %s17, 4
      %s24 = sphi 0, %s36
      %s25 = sphi 0, %s32
      %s26 = sphi 0, %s24
      %s27 = sphi 0, %s25
      %s28 = sphi 0, %s26
      %s29 = sphi 0, %s27
      %s45 = sphi 0, %s47
      %s48 = sphi 0, %s45
      %s49 = sphi 0, %s48
      %s65 = sphi 0, %s49
      %s77 = sphi 0, %s79
      %s80 = sphi 0, %s77
      %s81 = sphi 0, %s80
      %s97 = sphi 0, %s81
      %s109 = sphi 0, %s111
      %s112 = sphi 0, %s109
      %s113 = sphi 0, %s112
      %s129 = sphi 0, %s113
      %s135 = sphi 0, %s137
      %s138 = sphi 0, %s135
      %s139 = sphi 0, %s138
      %s155 = sphi 0, %s139
      %s161 = sphi 0, %s163
      %s164 = sphi 0, %s161
      %s165 = sphi 0, %s164
      %s181 = sphi 0, %s165
    $region4: #{tpu_custom_call.1} parent=1 // loop_header_branch
      %20 = sbr.rel (%p18) target = $region8
    $region5: #{tpu_custom_call.1} parent=1 // loop_body
      %s22 = ssub.s32 %s17, 1
      %s23 = ssub.s32 %s17, 2
      %s30 = sadd.s32 1, %s25
      %p31 = scmp.ge.s32.totalorder %s30, 1
      %s32 = scalar_select %p31, 0, %s30
      %s33 = sadd.s32 1, %s24
      %s34 = scalar_select %p31, %s33, %s24
      %p35 = scmp.ge.s32.totalorder %s34, 2
      %s36 = scalar_select %p35, 0, %s34
      %s37 = sadd.s32 %s24, %s25
      %p38 = scmp.lt.s32.totalorder %s37, 1
      %s39 = scalar_select %p38, %s37, 1
      %s40 = sadd.s32 %s36, %s32
      %p41 = scmp.lt.s32.totalorder %s40, 1
      %s42 = scalar_select %p41, %s40, 1
      %s43 = ssub.s32 %s39, %s42
      %p44 = scmp.eq.s32.totalorder %s43, 0
      %s46 = sadd.s32 %s45, 1
      %s47 = scalar_select %p44, %s45, %s46
      %p50 = pneg %p44
      %p51 = scmp.eq.s32.totalorder %s17, 1
      %p52 = por %p50, %p51
      %p53 = scmp.ne.s32.totalorder %s45, %s48
      %p54 = scmp.eq.s32.totalorder %s17, 0
      %p55 = por %p53, %p54
      %p56 = scmp.ne.s32.totalorder %s45, %s48
      %p57 = scmp.eq.s32.totalorder %s22, 1
      %p58 = por %p56, %p57
      %p59 = scmp.ne.s32.totalorder %s48, %s49
      %p60 = scmp.eq.s32.totalorder %s22, 0
      %p61 = por %p59, %p60
      %p62 = scmp.ne.s32.totalorder %s48, %s49
      %p63 = scmp.eq.s32.totalorder %s23, 1
      %p64 = por %p62, %p63
      %p66 = scmp.ne.s32.totalorder %s49, %s65
      %p67 = scmp.eq.s32.totalorder %s23, 0
      %p68 = por %p66, %p67
      %s69 = sadd.s32 %s24, %s25
      %p70 = scmp.lt.s32.totalorder %s69, 1
      %s71 = scalar_select %p70, %s69, 1
      %s72 = sadd.s32 %s36, %s32
      %p73 = scmp.lt.s32.totalorder %s72, 1
      %s74 = scalar_select %p73, %s72, 1
      %s75 = ssub.s32 %s71, %s74
      %p76 = scmp.eq.s32.totalorder %s75, 0
      %s78 = sadd.s32 %s77, 1
      %s79 = scalar_select %p76, %s77, %s78
      %p82 = pneg %p76
      %p83 = scmp.eq.s32.totalorder %s17, 1
      %p84 = por %p82, %p83
      %p85 = scmp.ne.s32.totalorder %s77, %s80
      %p86 = scmp.eq.s32.totalorder %s17, 0
      %p87 = por %p85, %p86
      %p88 = scmp.ne.s32.totalorder %s77, %s80
      %p89 = scmp.eq.s32.totalorder %s22, 1
      %p90 = por %p88, %p89
      %p91 = scmp.ne.s32.totalorder %s80, %s81
      %p92 = scmp.eq.s32.totalorder %s22, 0
      %p93 = por %p91, %p92
      %p94 = scmp.ne.s32.totalorder %s80, %s81
      %p95 = scmp.eq.s32.totalorder %s23, 1
      %p96 = por %p94, %p95
      %p98 = scmp.ne.s32.totalorder %s81, %s97
      %p99 = scmp.eq.s32.totalorder %s23, 0
      %p100 = por %p98, %p99
      %s101 = sadd.s32 %s24, %s25
      %p102 = scmp.lt.s32.totalorder %s101, 1
      %s103 = scalar_select %p102, %s101, 1
      %s104 = sadd.s32 %s36, %s32
      %p105 = scmp.lt.s32.totalorder %s104, 1
      %s106 = scalar_select %p105, %s104, 1
      %s107 = ssub.s32 %s103, %s106
      %p108 = scmp.eq.s32.totalorder %s107, 0
      %s110 = sadd.s32 %s109, 1
      %s111 = scalar_select %p108, %s109, %s110
      %p114 = pneg %p108
      %p115 = scmp.eq.s32.totalorder %s17, 1
      %p116 = por %p114, %p115
      %p117 = scmp.ne.s32.totalorder %s109, %s112
      %p118 = scmp.eq.s32.totalorder %s17, 0
      %p119 = por %p117, %p118
      %p120 = scmp.ne.s32.totalorder %s109, %s112
      %p121 = scmp.eq.s32.totalorder %s22, 1
      %p122 = por %p120, %p121
      %p123 = scmp.ne.s32.totalorder %s112, %s113
      %p124 = scmp.eq.s32.totalorder %s22, 0
      %p125 = por %p123, %p124
      %p126 = scmp.ne.s32.totalorder %s112, %s113
      %p127 = scmp.eq.s32.totalorder %s23, 1
      %p128 = por %p126, %p127
      %p130 = scmp.ne.s32.totalorder %s113, %s129
      %p131 = scmp.eq.s32.totalorder %s23, 0
      %p132 = por %p130, %p131
      %s133 = ssub.s32 %s24, %s36
      %p134 = scmp.eq.s32.totalorder %s133, 0
      %s136 = sadd.s32 %s135, 1
      %s137 = scalar_select %p134, %s135, %s136
      %p140 = pneg %p134
      %p141 = scmp.eq.s32.totalorder %s17, 1
      %p142 = por %p140, %p141
      %p143 = scmp.ne.s32.totalorder %s135, %s138
      %p144 = scmp.eq.s32.totalorder %s17, 0
      %p145 = por %p143, %p144
      %p146 = scmp.ne.s32.totalorder %s135, %s138
      %p147 = scmp.eq.s32.totalorder %s22, 1
      %p148 = por %p146, %p147
      %p149 = scmp.ne.s32.totalorder %s138, %s139
      %p150 = scmp.eq.s32.totalorder %s22, 0
      %p151 = por %p149, %p150
      %p152 = scmp.ne.s32.totalorder %s138, %s139
      %p153 = scmp.eq.s32.totalorder %s23, 1
      %p154 = por %p152, %p153
      %p156 = scmp.ne.s32.totalorder %s139, %s155
      %p157 = scmp.eq.s32.totalorder %s23, 0
      %p158 = por %p156, %p157
      %s159 = ssub.s32 %s24, %s36
      %p160 = scmp.eq.s32.totalorder %s159, 0
      %s162 = sadd.s32 %s161, 1
      %s163 = scalar_select %p160, %s161, %s162
      %p166 = pneg %p160
      %p167 = scmp.eq.s32.totalorder %s17, 1
      %p168 = por %p166, %p167
      %p169 = scmp.ne.s32.totalorder %s161, %s164
      %p170 = scmp.eq.s32.totalorder %s17, 0
      %p171 = por %p169, %p170
      %p172 = scmp.ne.s32.totalorder %s161, %s164
      %p173 = scmp.eq.s32.totalorder %s22, 1
      %p174 = por %p172, %p173
      %p175 = scmp.ne.s32.totalorder %s164, %s165
      %p176 = scmp.eq.s32.totalorder %s22, 0
      %p177 = por %p175, %p176
      %p178 = scmp.ne.s32.totalorder %s164, %s165
      %p179 = scmp.eq.s32.totalorder %s23, 1
      %p180 = por %p178, %p179
      %p182 = scmp.ne.s32.totalorder %s165, %s181
      %p183 = scmp.eq.s32.totalorder %s23, 0
      %p184 = por %p182, %p183
      %p185 = scmp.le.s32.totalorder 1, %s17
      %p186 = scmp.lt.s32.totalorder %s17, 3
      %p187 = pnand %p185, %p186
      %p188 = pneg %p187
      // Predicated region
      $region9: #{tpu_custom_call.1} parent=5 // pred_check
        _
      $region10: #{tpu_custom_call.1} parent=5 // pred_check_branch
        %190 = sbr.rel (%p187) target = $region12
      $region11: #{tpu_custom_call.1} parent=5 // pred_region
        %s191 = ssub.s32 %s17, 1
      $region12: #{tpu_custom_call.1} parent=5 // pred_fallthru
        _
      %p192 = scmp.lt.s32.totalorder %s17, 2
      // Predicated region
      $region13: #{tpu_custom_call.1} parent=5 // pred_check
        %p193 = pneg %p192
      $region14: #{tpu_custom_call.1} parent=5 // pred_check_branch
        %195 = sbr.rel (%p193) target = $region16
      $region15: #{tpu_custom_call.1} parent=5 // pred_region
        // Predicated region
        $region17: #{tpu_custom_call.1} parent=15 // pred_check
          %p196 = pneg %p55
        $region18: #{tpu_custom_call.1} parent=15 // pred_check_branch
          %198 = sbr.rel (%p196) target = $region20
        $region19: #{tpu_custom_call.1} parent=15 // pred_region
          %s199 = sadd.s32 %s24, %s25
          %p200 = scmp.lt.s32.totalorder %s199, 1
          %s201 = scalar_select %p200, %s199, 1
          %s202 = smul.u32 12, %s201
          %s203 = ssub.s32 13, %s202
          %p204 = scmp.lt.s32.totalorder %s203, 12
          %s205 = scalar_select %p204, %s203, 12
          %s206 = smul.u32 8, %s205
          %p207 = scmp.lt.s32.totalorder %s202, 12
          %s208 = scalar_select %p207, %s202, 12
          %s209 = smul.addr %s208, 8
          %s210 = scalar_lea.vmem %s0, %s209
          %s211 = sadd.s32 %s24, %s25
          %p212 = scmp.lt.s32.totalorder %s211, 1
          %s213 = scalar_select %p212, %s211, 1
          %s214 = smul.u32 12, %s213
          %s215 = ssub.s32 13, %s214
          %p216 = scmp.lt.s32.totalorder %s215, 12
          %s217 = scalar_select %p216, %s215, 12
          %s218 = smul.u32 8, %s217
        $region20: #{tpu_custom_call.1} parent=15 // pred_fallthru
          _
        // Predicated region
        $region21: #{tpu_custom_call.1} parent=15 // pred_check
          %p219 = pneg %p87
        $region22: #{tpu_custom_call.1} parent=15 // pred_check_branch
          %221 = sbr.rel (%p219) target = $region24
        $region23: #{tpu_custom_call.1} parent=15 // pred_region
          %s222 = sadd.s32 %s24, %s25
          %p223 = scmp.lt.s32.totalorder %s222, 1
          %s224 = scalar_select %p223, %s222, 1
          %s225 = smul.u32 12, %s224
          %s226 = ssub.s32 13, %s225
          %p227 = scmp.lt.s32.totalorder %s226, 12
          %s228 = scalar_select %p227, %s226, 12
          %s229 = smul.u32 8, %s228
          %p230 = scmp.lt.s32.totalorder %s225, 12
          %s231 = scalar_select %p230, %s225, 12
          %s232 = smul.addr %s231, 8
          %s233 = scalar_lea.vmem %s1, %s232
          %s234 = sadd.s32 %s24, %s25
          %p235 = scmp.lt.s32.totalorder %s234, 1
          %s236 = scalar_select %p235, %s234, 1
          %s237 = smul.u32 12, %s236
          %s238 = ssub.s32 13, %s237
          %p239 = scmp.lt.s32.totalorder %s238, 12
          %s240 = scalar_select %p239, %s238, 12
          %s241 = smul.u32 8, %s240
        $region24: #{tpu_custom_call.1} parent=15 // pred_fallthru
          _
        // Predicated region
        $region25: #{tpu_custom_call.1} parent=15 // pred_check
          %p242 = pneg %p119
        $region26: #{tpu_custom_call.1} parent=15 // pred_check_branch
          %244 = sbr.rel (%p242) target = $region28
        $region27: #{tpu_custom_call.1} parent=15 // pred_region
          %s245 = sadd.s32 %s24, %s25
          %p246 = scmp.lt.s32.totalorder %s245, 1
          %s247 = scalar_select %p246, %s245, 1
          %s248 = smul.u32 12, %s247
          %s249 = ssub.s32 13, %s248
          %p250 = scmp.lt.s32.totalorder %s249, 12
          %s251 = scalar_select %p250, %s249, 12
          %s252 = smul.u32 8, %s251
          %p253 = scmp.lt.s32.totalorder %s248, 12
          %s254 = scalar_select %p253, %s248, 12
          %s255 = smul.addr %s254, 8
          %s256 = scalar_lea.vmem %s2, %s255
          %s257 = sadd.s32 %s24, %s25
          %p258 = scmp.lt.s32.totalorder %s257, 1
          %s259 = scalar_select %p258, %s257, 1
          %s260 = smul.u32 12, %s259
          %s261 = ssub.s32 13, %s260
          %p262 = scmp.lt.s32.totalorder %s261, 12
          %s263 = scalar_select %p262, %s261, 12
          %s264 = smul.u32 8, %s263
        $region28: #{tpu_custom_call.1} parent=15 // pred_fallthru
          _
      $region16: #{tpu_custom_call.1} parent=5 // pred_fallthru
        _
      %p265 = scmp.le.s32.totalorder 1, %s17
      %p266 = scmp.lt.s32.totalorder %s17, 3
      %p267 = pnand %p265, %p266
      %p268 = pneg %p267
      // Predicated region
      $region29: #{tpu_custom_call.1} parent=5 // pred_check
        _
      $region30: #{tpu_custom_call.1} parent=5 // pred_check_branch
        %270 = sbr.rel (%p267) target = $region32
      $region31: #{tpu_custom_call.1} parent=5 // pred_region
        %s271 = ssub.s32 %s17, 1
        %s272 = sadd.s32 %s26, %s27
        %p273 = scmp.lt.s32.totalorder %s272, 1
        %s274 = scalar_select %p273, %s272, 1
        %s275 = smul.u32 12, %s274
        %s276 = ssub.s32 13, %s275
        %p277 = scmp.lt.s32.totalorder %s276, 12
        %s278 = scalar_select %p277, %s276, 12
        %s279 = smul.u32 8, %s278
        %p280 = scmp.lt.s32.totalorder %s275, 12
        %s281 = scalar_select %p280, %s275, 12
        %s282 = smul.addr %s281, 8
        %s283 = scalar_lea.vmem %s0, %s282
        %p284 = pneg %p61
        %p285 = pneg %p58
        %s286 = sadd.s32 %s26, %s27
        %p287 = scmp.lt.s32.totalorder %s286, 1
        %s288 = scalar_select %p287, %s286, 1
        %s289 = smul.u32 12, %s288
        %s290 = ssub.s32 13, %s289
        %p291 = scmp.lt.s32.totalorder %s290, 12
        %s292 = scalar_select %p291, %s290, 12
        %s293 = smul.u32 8, %s292
        %p294 = scmp.lt.s32.totalorder %s289, 12
        %s295 = scalar_select %p294, %s289, 12
        %s296 = smul.addr %s295, 8
        %s297 = scalar_lea.vmem %s1, %s296
        %p298 = pneg %p93
        %p299 = pneg %p90
        %s300 = sadd.s32 %s26, %s27
        %p301 = scmp.lt.s32.totalorder %s300, 1
        %s302 = scalar_select %p301, %s300, 1
        %s303 = smul.u32 12, %s302
        %s304 = ssub.s32 13, %s303
        %p305 = scmp.lt.s32.totalorder %s304, 12
        %s306 = scalar_select %p305, %s304, 12
        %s307 = smul.u32 8, %s306
        %p308 = scmp.lt.s32.totalorder %s303, 12
        %s309 = scalar_select %p308, %s303, 12
        %s310 = smul.addr %s309, 8
        %s311 = scalar_lea.vmem %s2, %s310
        %p312 = pneg %p125
        %p313 = pneg %p122
        %p314 = pneg %p151
        %p315 = pneg %p148
        %s316 = sand.u32 %s138, 1
        %s317 = scalar_lea.sflag [#allocation5], %s316
        %s318 = sand.u32 %s138, 1
        %s319 = smul.addr %s318, 8
        %s320 = scalar_lea.vmem [#allocation4], %s319
        %p321 = pneg %p177
        %p322 = pneg %p174
        %s323 = sand.u32 %s164, 1
        %s324 = scalar_lea.sflag [#allocation7], %s323
        %s325 = sand.u32 %s164, 1
        %s326 = smul.addr %s325, 8
        %s327 = scalar_lea.vmem [#allocation6], %s326
        %s328 = sadd.s32 %s26, %s27
        %p329 = scmp.lt.s32.totalorder %s328, 1
        %s330 = scalar_select %p329, %s328, 1
        %s331 = smul.u32 12, %s330
        %s332 = ssub.s32 13, %s331
        %p333 = scmp.lt.s32.totalorder %s332, 12
        %s334 = scalar_select %p333, %s332, 12
        %s335 = smul.u32 8, %s334
        %p336 = scmp.lt.s32.totalorder %s331, 12
        %s337 = scalar_select %p336, %s331, 12
        %s338 = smul.addr %s337, 8
        %s339 = scalar_lea.vmem %s0, %s338
        %s340 = sadd.s32 %s26, %s27
        %p341 = scmp.lt.s32.totalorder %s340, 1
        %s342 = scalar_select %p341, %s340, 1
        %s343 = smul.u32 12, %s342
        %s344 = ssub.s32 13, %s343
        %p345 = scmp.lt.s32.totalorder %s344, 12
        %s346 = scalar_select %p345, %s344, 12
        %s347 = smul.u32 8, %s346
        %s348 = sadd.s32 %s26, %s27
        %p349 = scmp.lt.s32.totalorder %s348, 1
        %s350 = scalar_select %p349, %s348, 1
        %s351 = smul.u32 12, %s350
        %s352 = ssub.s32 13, %s351
        %p353 = scmp.lt.s32.totalorder %s352, 12
        %s354 = scalar_select %p353, %s352, 12
        %s355 = smul.u32 8, %s354
        %p356 = scmp.lt.s32.totalorder %s351, 12
        %s357 = scalar_select %p356, %s351, 12
        %s358 = smul.addr %s357, 8
        %s359 = scalar_lea.vmem %s1, %s358
        %s360 = sadd.s32 %s26, %s27
        %p361 = scmp.lt.s32.totalorder %s360, 1
        %s362 = scalar_select %p361, %s360, 1
        %s363 = smul.u32 12, %s362
        %s364 = ssub.s32 13, %s363
        %p365 = scmp.lt.s32.totalorder %s364, 12
        %s366 = scalar_select %p365, %s364, 12
        %s367 = smul.u32 8, %s366
        %s368 = sadd.s32 %s26, %s27
        %p369 = scmp.lt.s32.totalorder %s368, 1
        %s370 = scalar_select %p369, %s368, 1
        %s371 = smul.u32 12, %s370
        %s372 = ssub.s32 13, %s371
        %p373 = scmp.lt.s32.totalorder %s372, 12
        %s374 = scalar_select %p373, %s372, 12
        %s375 = smul.u32 8, %s374
        %p376 = scmp.lt.s32.totalorder %s371, 12
        %s377 = scalar_select %p376, %s371, 12
        %s378 = smul.addr %s377, 8
        %s379 = scalar_lea.vmem %s2, %s378
        %s380 = sadd.s32 %s26, %s27
        %p381 = scmp.lt.s32.totalorder %s380, 1
        %s382 = scalar_select %p381, %s380, 1
        %s383 = smul.u32 12, %s382
        %s384 = ssub.s32 13, %s383
        %p385 = scmp.lt.s32.totalorder %s384, 12
        %s386 = scalar_select %p385, %s384, 12
        %s387 = smul.u32 8, %s386
        %p388 = scmp.eq.s32.totalorder %s27, 0
        // Predicated region
        $region33: #{tpu_custom_call.1} parent=31 // pred_check
          %p389 = pneg %p388
        $region34: #{tpu_custom_call.1} parent=31 // pred_check_branch
          %391 = sbr.rel (%p389) target = $region36
        $region35: #{tpu_custom_call.1} parent=31 // pred_region
          %vm392 = vcmask 130048
          %393 = vst.msk [vmem:[#allocation2] sm:$0xff] %vm392, 0.0
          %394 = vst.msk [vmem:[#allocation2 + $0x8] sm:$0xff] %vm392, 0.0
          %395 = vst.msk [vmem:[#allocation2 + $0x10] sm:$0xff] %vm392, 0.0
          %396 = vst.msk [vmem:[#allocation2 + $0x18] sm:$0xff] %vm392, 0.0
          %397 = vst.msk [vmem:[#allocation2 + $0x20] sm:$0xff] %vm392, 0.0
          %398 = vst.msk [vmem:[#allocation2 + $0x28] sm:$0xff] %vm392, 0.0
          %399 = vst.msk [vmem:[#allocation2 + $0x30] sm:$0xff] %vm392, 0.0
          %400 = vst.msk [vmem:[#allocation2 + $0x38] sm:$0xff] %vm392, 0.0
          %401 = vst.msk [vmem:[#allocation2 + $0x40] sm:$0xff] %vm392, 0.0
          %402 = vst.msk [vmem:[#allocation2 + $0x48] sm:$0xff] %vm392, 0.0
          %403 = vst.msk [vmem:[#allocation2 + $0x50] sm:$0xff] %vm392, 0.0
          %404 = vst.msk [vmem:[#allocation2 + $0x58] sm:$0xff] %vm392, 0.0
          %405 = vst.msk [vmem:[#allocation3] sm:$0xff] %vm392, 0.0
          %406 = vst.msk [vmem:[#allocation3 + $0x8] sm:$0xff] %vm392, 0.0
          %407 = vst.msk [vmem:[#allocation3 + $0x10] sm:$0xff] %vm392, 0.0
          %408 = vst.msk [vmem:[#allocation3 + $0x18] sm:$0xff] %vm392, 0.0
          %409 = vst.msk [vmem:[#allocation3 + $0x20] sm:$0xff] %vm392, 0.0
          %410 = vst.msk [vmem:[#allocation3 + $0x28] sm:$0xff] %vm392, 0.0
          %411 = vst.msk [vmem:[#allocation3 + $0x30] sm:$0xff] %vm392, 0.0
          %412 = vst.msk [vmem:[#allocation3 + $0x38] sm:$0xff] %vm392, 0.0
          %413 = vst.msk [vmem:[#allocation3 + $0x40] sm:$0xff] %vm392, 0.0
          %414 = vst.msk [vmem:[#allocation3 + $0x48] sm:$0xff] %vm392, 0.0
          %415 = vst.msk [vmem:[#allocation3 + $0x50] sm:$0xff] %vm392, 0.0
          %416 = vst.msk [vmem:[#allocation3 + $0x58] sm:$0xff] %vm392, 0.0
        $region36: #{tpu_custom_call.1} parent=31 // pred_fallthru
          _
        %v417 = vld [vmem:[%s339] sm:$0xff]
        %v418 = vld [vmem:[%s339 + $0x8] sm:$0xff]
        %v419 = vld [vmem:[%s339 + $0x10] sm:$0xff]
        %v420 = vld [vmem:[%s339 + $0x18] sm:$0xff]
        %v421 = vld [vmem:[%s339 + $0x20] sm:$0xff]
        %v422 = vld [vmem:[%s339 + $0x28] sm:$0xff]
        %v423 = vld [vmem:[%s339 + $0x30] sm:$0xff]
        %v424 = vld [vmem:[%s339 + $0x38] sm:$0xff]
        %v425 = vld [vmem:[%s339 + $0x40] sm:$0xff]
        %v426 = vld [vmem:[%s339 + $0x48] sm:$0xff]
        %v427 = vld [vmem:[%s339 + $0x50] sm:$0xff]
        %v428 = vld [vmem:[%s339 + $0x58] sm:$0xff]
        %v429 = vld [vmem:[%s359] sm:$0xff]
        %v430 = vld [vmem:[%s359 + $0x8] sm:$0xff]
        %v431 = vld [vmem:[%s359 + $0x10] sm:$0xff]
        %v432 = vld [vmem:[%s359 + $0x18] sm:$0xff]
        %v433 = vld [vmem:[%s359 + $0x20] sm:$0xff]
        %v434 = vld [vmem:[%s359 + $0x28] sm:$0xff]
        %v435 = vld [vmem:[%s359 + $0x30] sm:$0xff]
        %v436 = vld [vmem:[%s359 + $0x38] sm:$0xff]
        %v437 = vld [vmem:[%s359 + $0x40] sm:$0xff]
        %v438 = vld [vmem:[%s359 + $0x48] sm:$0xff]
        %v439 = vld [vmem:[%s359 + $0x50] sm:$0xff]
        %v440 = vld [vmem:[%s359 + $0x58] sm:$0xff]
        %v441 = vld [vmem:[%s379] sm:$0xff]
        %v442 = vld [vmem:[%s379 + $0x8] sm:$0xff]
        %v443 = vld [vmem:[%s379 + $0x10] sm:$0xff]
        %v444 = vld [vmem:[%s379 + $0x18] sm:$0xff]
        %v445 = vld [vmem:[%s379 + $0x20] sm:$0xff]
        %v446 = vld [vmem:[%s379 + $0x28] sm:$0xff]
        %v447 = vld [vmem:[%s379 + $0x30] sm:$0xff]
        %v448 = vld [vmem:[%s379 + $0x38] sm:$0xff]
        %v449 = vld [vmem:[%s379 + $0x40] sm:$0xff]
        %v450 = vld [vmem:[%s379 + $0x48] sm:$0xff]
        %v451 = vld [vmem:[%s379 + $0x50] sm:$0xff]
        %v452 = vld [vmem:[%s379 + $0x58] sm:$0xff]
        %v453 = vlaneseq
        %v454 = vand.u32 %v453, 127
        %455 = vset.pattern.permute.xlu0 0
        %456 = vperm.xlu0 %455, %v429
        %v457 = vpop.permute.xlu0 %456
        %458 = vset.pattern.permute.xlu0 0
        %459 = vperm.xlu0 %458, %v430
        %v460 = vpop.permute.xlu0 %459
        %461 = vset.pattern.permute.xlu0 0
        %462 = vperm.xlu0 %461, %v431
        %v463 = vpop.permute.xlu0 %462
        %464 = vset.pattern.permute.xlu0 0
        %465 = vperm.xlu0 %464, %v432
        %v466 = vpop.permute.xlu0 %465
        %467 = vset.pattern.permute.xlu0 0
        %468 = vperm.xlu0 %467, %v433
        %v469 = vpop.permute.xlu0 %468
        %470 = vset.pattern.permute.xlu0 0
        %471 = vperm.xlu0 %470, %v434
        %v472 = vpop.permute.xlu0 %471
        %473 = vset.pattern.permute.xlu0 0
        %474 = vperm.xlu0 %473, %v435
        %v475 = vpop.permute.xlu0 %474
        %476 = vset.pattern.permute.xlu0 0
        %477 = vperm.xlu0 %476, %v436
        %v478 = vpop.permute.xlu0 %477
        %479 = vset.pattern.permute.xlu0 0
        %480 = vperm.xlu0 %479, %v437
        %v481 = vpop.permute.xlu0 %480
        %482 = vset.pattern.permute.xlu0 0
        %483 = vperm.xlu0 %482, %v438
        %v484 = vpop.permute.xlu0 %483
        %485 = vset.pattern.permute.xlu0 0
        %486 = vperm.xlu0 %485, %v439
        %v487 = vpop.permute.xlu0 %486
        %488 = vset.pattern.permute.xlu0 0
        %489 = vperm.xlu0 %488, %v440
        %v490 = vpop.permute.xlu0 %489
        %vm491 = vcmp.eq.s32.totalorder %v454, %v457
        %vm492 = vcmp.eq.s32.totalorder %v454, %v460
        %vm493 = vcmp.eq.s32.totalorder %v454, %v463
        %vm494 = vcmp.eq.s32.totalorder %v454, %v466
        %vm495 = vcmp.eq.s32.totalorder %v454, %v469
        %vm496 = vcmp.eq.s32.totalorder %v454, %v472
        %vm497 = vcmp.eq.s32.totalorder %v454, %v475
        %vm498 = vcmp.eq.s32.totalorder %v454, %v478
        %vm499 = vcmp.eq.s32.totalorder %v454, %v481
        %vm500 = vcmp.eq.s32.totalorder %v454, %v484
        %vm501 = vcmp.eq.s32.totalorder %v454, %v487
        %vm502 = vcmp.eq.s32.totalorder %v454, %v490
        %vm503 = vcmp.gt.f32.partialorder %v417, 0.0
        %vm504 = vcmp.gt.f32.partialorder %v418, 0.0
        %vm505 = vcmp.gt.f32.partialorder %v419, 0.0
        %vm506 = vcmp.gt.f32.partialorder %v420, 0.0
        %vm507 = vcmp.gt.f32.partialorder %v421, 0.0
        %vm508 = vcmp.gt.f32.partialorder %v422, 0.0
        %vm509 = vcmp.gt.f32.partialorder %v423, 0.0
        %vm510 = vcmp.gt.f32.partialorder %v424, 0.0
        %vm511 = vcmp.gt.f32.partialorder %v425, 0.0
        %vm512 = vcmp.gt.f32.partialorder %v426, 0.0
        %vm513 = vcmp.gt.f32.partialorder %v427, 0.0
        %vm514 = vcmp.gt.f32.partialorder %v428, 0.0
        %v515 = vsel %vm503, %v417, 1.0
        %v516 = vsel %vm504, %v418, 1.0
        %v517 = vsel %vm505, %v419, 1.0
        %v518 = vsel %vm506, %v420, 1.0
        %v519 = vsel %vm507, %v421, 1.0
        %v520 = vsel %vm508, %v422, 1.0
        %v521 = vsel %vm509, %v423, 1.0
        %v522 = vsel %vm510, %v424, 1.0
        %v523 = vsel %vm511, %v425, 1.0
        %v524 = vsel %vm512, %v426, 1.0
        %v525 = vsel %vm513, %v427, 1.0
        %v526 = vsel %vm514, %v428, 1.0
        %v527 = vlog2.pop %v515
        %v528 = vmul.f32 %v527, 0.6931472
        %v529 = vlog2.pop %v516
        %v530 = vmul.f32 %v529, 0.6931472
        %v531 = vlog2.pop %v517
        %v532 = vmul.f32 %v531, 0.6931472
        %v533 = vlog2.pop %v518
        %v534 = vmul.f32 %v533, 0.6931472
        %v535 = vlog2.pop %v519
        %v536 = vmul.f32 %v535, 0.6931472
        %v537 = vlog2.pop %v520
        %v538 = vmul.f32 %v537, 0.6931472
        %v539 = vlog2.pop %v521
        %v540 = vmul.f32 %v539, 0.6931472
        %v541 = vlog2.pop %v522
        %v542 = vmul.f32 %v541, 0.6931472
        %v543 = vlog2.pop %v523
        %v544 = vmul.f32 %v543, 0.6931472
        %v545 = vlog2.pop %v524
        %v546 = vmul.f32 %v545, 0.6931472
        %v547 = vlog2.pop %v525
        %v548 = vmul.f32 %v547, 0.6931472
        %v549 = vlog2.pop %v526
        %v550 = vmul.f32 %v549, 0.6931472
        %v551 = vmul.f32 %v417, %v528
        %v552 = vmul.f32 %v418, %v530
        %v553 = vmul.f32 %v419, %v532
        %v554 = vmul.f32 %v420, %v534
        %v555 = vmul.f32 %v421, %v536
        %v556 = vmul.f32 %v422, %v538
        %v557 = vmul.f32 %v423, %v540
        %v558 = vmul.f32 %v424, %v542
        %v559 = vmul.f32 %v425, %v544
        %v560 = vmul.f32 %v426, %v546
        %v561 = vmul.f32 %v427, %v548
        %v562 = vmul.f32 %v428, %v550
        %v563 = vsel %vm503, %v551, 0.0
        %v564 = vsel %vm504, %v552, 0.0
        %v565 = vsel %vm505, %v553, 0.0
        %v566 = vsel %vm506, %v554, 0.0
        %v567 = vsel %vm507, %v555, 0.0
        %v568 = vsel %vm508, %v556, 0.0
        %v569 = vsel %vm509, %v557, 0.0
        %v570 = vsel %vm510, %v558, 0.0
        %v571 = vsel %vm511, %v559, 0.0
        %v572 = vsel %vm512, %v560, 0.0
        %v573 = vsel %vm513, %v561, 0.0
        %v574 = vsel %vm514, %v562, 0.0
        %576 = vset.pattern.permute.xlu0 0
        %577 = vperm.xlu0 %576, %v441
        %v578 = vpop.permute.xlu0 %577
        %581 = vset.pattern.permute.xlu0 0
        %582 = vperm.xlu0 %581, %v442
        %v583 = vpop.permute.xlu0 %582
        %586 = vset.pattern.permute.xlu0 0
        %587 = vperm.xlu0 %586, %v443
        %v588 = vpop.permute.xlu0 %587
        %591 = vset.pattern.permute.xlu0 0
        %592 = vperm.xlu0 %591, %v444
        %v593 = vpop.permute.xlu0 %592
        %596 = vset.pattern.permute.xlu0 0
        %597 = vperm.xlu0 %596, %v445
        %v598 = vpop.permute.xlu0 %597
        %601 = vset.pattern.permute.xlu0 0
        %602 = vperm.xlu0 %601, %v446
        %v603 = vpop.permute.xlu0 %602
        %606 = vset.pattern.permute.xlu0 0
        %607 = vperm.xlu0 %606, %v447
        %v608 = vpop.permute.xlu0 %607
        %611 = vset.pattern.permute.xlu0 0
        %612 = vperm.xlu0 %611, %v448
        %v613 = vpop.permute.xlu0 %612
        %616 = vset.pattern.permute.xlu0 0
        %617 = vperm.xlu0 %616, %v449
        %v618 = vpop.permute.xlu0 %617
        %621 = vset.pattern.permute.xlu0 0
        %622 = vperm.xlu0 %621, %v450
        %v623 = vpop.permute.xlu0 %622
        %626 = vset.pattern.permute.xlu0 0
        %627 = vperm.xlu0 %626, %v451
        %v628 = vpop.permute.xlu0 %627
        %631 = vset.pattern.permute.xlu0 0
        %632 = vperm.xlu0 %631, %v452
        %v633 = vpop.permute.xlu0 %632
        %v635 = vmul.f32 %v417, %v578
        %v636 = vmul.f32 %v418, %v583
        %v637 = vmul.f32 %v419, %v588
        %v638 = vmul.f32 %v420, %v593
        %v639 = vmul.f32 %v421, %v598
        %v640 = vmul.f32 %v422, %v603
        %v641 = vmul.f32 %v423, %v608
        %v642 = vmul.f32 %v424, %v613
        %v643 = vmul.f32 %v425, %v618
        %v644 = vmul.f32 %v426, %v623
        %v645 = vmul.f32 %v427, %v628
        %v646 = vmul.f32 %v428, %v633
        %v647 = vsel %vm491, %v635, 0.0
        %v648 = vsel %vm492, %v636, 0.0
        %v649 = vsel %vm493, %v637, 0.0
        %v650 = vsel %vm494, %v638, 0.0
        %v651 = vsel %vm495, %v639, 0.0
        %v652 = vsel %vm496, %v640, 0.0
        %v653 = vsel %vm497, %v641, 0.0
        %v654 = vsel %vm498, %v642, 0.0
        %v655 = vsel %vm499, %v643, 0.0
        %v656 = vsel %vm500, %v644, 0.0
        %v657 = vsel %vm501, %v645, 0.0
        %v658 = vsel %vm502, %v646, 0.0
        %s659 = sadd.s32 %s26, %s27
        %v660 = vlaneseq
        %v661 = vshrl.u32 %v660, 7
        %v662 = vadd.s32 %v661, 8
        %v663 = vadd.s32 %v661, 16
        %v664 = vadd.s32 %v661, 24
        %v665 = vadd.s32 %v661, 32
        %v666 = vadd.s32 %v661, 40
        %v667 = vadd.s32 %v661, 48
        %v668 = vadd.s32 %v661, 56
        %v669 = vadd.s32 %v661, 64
        %v670 = vadd.s32 %v661, 72
        %v671 = vadd.s32 %v661, 80
        %v672 = vadd.s32 %v661, 88
        %s673 = smul.u32 %s659, 96
        %v674 = vstv %s673
        %v675 = vadd.s32 %v674, %v661
        %v676 = vadd.s32 %v674, %v662
        %v677 = vadd.s32 %v674, %v663
        %v678 = vadd.s32 %v674, %v664
        %v679 = vadd.s32 %v674, %v665
        %v680 = vadd.s32 %v674, %v666
        %v681 = vadd.s32 %v674, %v667
        %v682 = vadd.s32 %v674, %v668
        %v683 = vadd.s32 %v674, %v669
        %v684 = vadd.s32 %v674, %v670
        %v685 = vadd.s32 %v674, %v671
        %v686 = vadd.s32 %v674, %v672
        %vm687 = vcmp.lt.s32.totalorder %v675, 100
        %vm688 = vcmp.lt.s32.totalorder %v676, 100
        %vm689 = vcmp.lt.s32.totalorder %v677, 100
        %vm690 = vcmp.lt.s32.totalorder %v678, 100
        %vm691 = vcmp.lt.s32.totalorder %v679, 100
        %vm692 = vcmp.lt.s32.totalorder %v680, 100
        %vm693 = vcmp.lt.s32.totalorder %v681, 100
        %vm694 = vcmp.lt.s32.totalorder %v682, 100
        %vm695 = vcmp.lt.s32.totalorder %v683, 100
        %vm696 = vcmp.lt.s32.totalorder %v684, 100
        %vm697 = vcmp.lt.s32.totalorder %v685, 100
        %vm698 = vcmp.lt.s32.totalorder %v686, 100
        %v699 = vsel %vm687, 1, 0
        %v700 = vsel %vm688, 1, 0
        %v701 = vsel %vm689, 1, 0
        %v702 = vsel %vm690, 1, 0
        %v703 = vsel %vm691, 1, 0
        %v704 = vsel %vm692, 1, 0
        %v705 = vsel %vm693, 1, 0
        %v706 = vsel %vm694, 1, 0
        %v707 = vsel %vm695, 1, 0
        %v708 = vsel %vm696, 1, 0
        %v709 = vsel %vm697, 1, 0
        %v710 = vsel %vm698, 1, 0
        %vm711 = vcmp.eq.s32.totalorder %v699, 1
        %vm712 = vcmp.eq.s32.totalorder %v700, 1
        %vm713 = vcmp.eq.s32.totalorder %v701, 1
        %vm714 = vcmp.eq.s32.totalorder %v702, 1
        %vm715 = vcmp.eq.s32.totalorder %v703, 1
        %vm716 = vcmp.eq.s32.totalorder %v704, 1
        %vm717 = vcmp.eq.s32.totalorder %v705, 1
        %vm718 = vcmp.eq.s32.totalorder %v706, 1
        %vm719 = vcmp.eq.s32.totalorder %v707, 1
        %vm720 = vcmp.eq.s32.totalorder %v708, 1
        %vm721 = vcmp.eq.s32.totalorder %v709, 1
        %vm722 = vcmp.eq.s32.totalorder %v710, 1
        %v723 = vsel %vm711, %v563, 0.0
        %v724 = vsel %vm712, %v564, 0.0
        %v725 = vsel %vm713, %v565, 0.0
        %v726 = vsel %vm714, %v566, 0.0
        %v727 = vsel %vm715, %v567, 0.0
        %v728 = vsel %vm716, %v568, 0.0
        %v729 = vsel %vm717, %v569, 0.0
        %v730 = vsel %vm718, %v570, 0.0
        %v731 = vsel %vm719, %v571, 0.0
        %v732 = vsel %vm720, %v572, 0.0
        %v733 = vsel %vm721, %v573, 0.0
        %v734 = vsel %vm722, %v574, 0.0
        %v735 = vsel %vm711, %v647, 0.0
        %v736 = vsel %vm712, %v648, 0.0
        %v737 = vsel %vm713, %v649, 0.0
        %v738 = vsel %vm714, %v650, 0.0
        %v739 = vsel %vm715, %v651, 0.0
        %v740 = vsel %vm716, %v652, 0.0
        %v741 = vsel %vm717, %v653, 0.0
        %v742 = vsel %vm718, %v654, 0.0
        %v743 = vsel %vm719, %v655, 0.0
        %v744 = vsel %vm720, %v656, 0.0
        %v745 = vsel %vm721, %v657, 0.0
        %v746 = vsel %vm722, %v658, 0.0
        %v747 = vld [vmem:[#allocation2] sm:$0xff]
        %v748 = vld [vmem:[#allocation2 + $0x8] sm:$0xff]
        %v749 = vld [vmem:[#allocation2 + $0x10] sm:$0xff]
        %v750 = vld [vmem:[#allocation2 + $0x18] sm:$0xff]
        %v751 = vld [vmem:[#allocation2 + $0x20] sm:$0xff]
        %v752 = vld [vmem:[#allocation2 + $0x28] sm:$0xff]
        %v753 = vld [vmem:[#allocation2 + $0x30] sm:$0xff]
        %v754 = vld [vmem:[#allocation2 + $0x38] sm:$0xff]
        %v755 = vld [vmem:[#allocation2 + $0x40] sm:$0xff]
        %v756 = vld [vmem:[#allocation2 + $0x48] sm:$0xff]
        %v757 = vld [vmem:[#allocation2 + $0x50] sm:$0xff]
        %v758 = vld [vmem:[#allocation2 + $0x58] sm:$0xff]
        %v759 = vadd.f32 %v747, %v723
        %v760 = vadd.f32 %v748, %v724
        %v761 = vadd.f32 %v749, %v725
        %v762 = vadd.f32 %v750, %v726
        %v763 = vadd.f32 %v751, %v727
        %v764 = vadd.f32 %v752, %v728
        %v765 = vadd.f32 %v753, %v729
        %v766 = vadd.f32 %v754, %v730
        %v767 = vadd.f32 %v755, %v731
        %v768 = vadd.f32 %v756, %v732
        %v769 = vadd.f32 %v757, %v733
        %v770 = vadd.f32 %v758, %v734
        %vm771 = vcmask 130048
        %772 = vst.msk [vmem:[#allocation2] sm:$0xff] %vm771, %v759
        %773 = vst.msk [vmem:[#allocation2 + $0x8] sm:$0xff] %vm771, %v760
        %774 = vst.msk [vmem:[#allocation2 + $0x10] sm:$0xff] %vm771, %v761
        %775 = vst.msk [vmem:[#allocation2 + $0x18] sm:$0xff] %vm771, %v762
        %776 = vst.msk [vmem:[#allocation2 + $0x20] sm:$0xff] %vm771, %v763
        %777 = vst.msk [vmem:[#allocation2 + $0x28] sm:$0xff] %vm771, %v764
        %778 = vst.msk [vmem:[#allocation2 + $0x30] sm:$0xff] %vm771, %v765
        %779 = vst.msk [vmem:[#allocation2 + $0x38] sm:$0xff] %vm771, %v766
        %780 = vst.msk [vmem:[#allocation2 + $0x40] sm:$0xff] %vm771, %v767
        %781 = vst.msk [vmem:[#allocation2 + $0x48] sm:$0xff] %vm771, %v768
        %782 = vst.msk [vmem:[#allocation2 + $0x50] sm:$0xff] %vm771, %v769
        %783 = vst.msk [vmem:[#allocation2 + $0x58] sm:$0xff] %vm771, %v770
        %v784 = vld [vmem:[#allocation3] sm:$0xff]
        %v785 = vld [vmem:[#allocation3 + $0x8] sm:$0xff]
        %v786 = vld [vmem:[#allocation3 + $0x10] sm:$0xff]
        %v787 = vld [vmem:[#allocation3 + $0x18] sm:$0xff]
        %v788 = vld [vmem:[#allocation3 + $0x20] sm:$0xff]
        %v789 = vld [vmem:[#allocation3 + $0x28] sm:$0xff]
        %v790 = vld [vmem:[#allocation3 + $0x30] sm:$0xff]
        %v791 = vld [vmem:[#allocation3 + $0x38] sm:$0xff]
        %v792 = vld [vmem:[#allocation3 + $0x40] sm:$0xff]
        %v793 = vld [vmem:[#allocation3 + $0x48] sm:$0xff]
        %v794 = vld [vmem:[#allocation3 + $0x50] sm:$0xff]
        %v795 = vld [vmem:[#allocation3 + $0x58] sm:$0xff]
        %v796 = vadd.f32 %v784, %v735
        %v797 = vadd.f32 %v785, %v736
        %v798 = vadd.f32 %v786, %v737
        %v799 = vadd.f32 %v787, %v738
        %v800 = vadd.f32 %v788, %v739
        %v801 = vadd.f32 %v789, %v740
        %v802 = vadd.f32 %v790, %v741
        %v803 = vadd.f32 %v791, %v742
        %v804 = vadd.f32 %v792, %v743
        %v805 = vadd.f32 %v793, %v744
        %v806 = vadd.f32 %v794, %v745
        %v807 = vadd.f32 %v795, %v746
        %808 = vst.msk [vmem:[#allocation3] sm:$0xff] %vm771, %v796
        %809 = vst.msk [vmem:[#allocation3 + $0x8] sm:$0xff] %vm771, %v797
        %810 = vst.msk [vmem:[#allocation3 + $0x10] sm:$0xff] %vm771, %v798
        %811 = vst.msk [vmem:[#allocation3 + $0x18] sm:$0xff] %vm771, %v799
        %812 = vst.msk [vmem:[#allocation3 + $0x20] sm:$0xff] %vm771, %v800
        %813 = vst.msk [vmem:[#allocation3 + $0x28] sm:$0xff] %vm771, %v801
        %814 = vst.msk [vmem:[#allocation3 + $0x30] sm:$0xff] %vm771, %v802
        %815 = vst.msk [vmem:[#allocation3 + $0x38] sm:$0xff] %vm771, %v803
        %816 = vst.msk [vmem:[#allocation3 + $0x40] sm:$0xff] %vm771, %v804
        %817 = vst.msk [vmem:[#allocation3 + $0x48] sm:$0xff] %vm771, %v805
        %818 = vst.msk [vmem:[#allocation3 + $0x50] sm:$0xff] %vm771, %v806
        %819 = vst.msk [vmem:[#allocation3 + $0x58] sm:$0xff] %vm771, %v807
        // Predicated region
        $region37: #{tpu_custom_call.1} parent=31 // pred_check
          %p820 = pneg %p388
        $region38: #{tpu_custom_call.1} parent=31 // pred_check_branch
          %822 = sbr.rel (%p820) target = $region40
        $region39: #{tpu_custom_call.1} parent=31 // pred_region
          %v823 = vld [vmem:[#allocation2] sm:$0xff]
          %v824 = vld [vmem:[#allocation2 + $0x8] sm:$0xff]
          %v825 = vld [vmem:[#allocation2 + $0x10] sm:$0xff]
          %v826 = vld [vmem:[#allocation2 + $0x18] sm:$0xff]
          %v827 = vld [vmem:[#allocation2 + $0x20] sm:$0xff]
          %v828 = vld [vmem:[#allocation2 + $0x28] sm:$0xff]
          %v829 = vld [vmem:[#allocation2 + $0x30] sm:$0xff]
          %v830 = vld [vmem:[#allocation2 + $0x38] sm:$0xff]
          %v831 = vld [vmem:[#allocation2 + $0x40] sm:$0xff]
          %v832 = vld [vmem:[#allocation2 + $0x48] sm:$0xff]
          %v833 = vld [vmem:[#allocation2 + $0x50] sm:$0xff]
          %v834 = vld [vmem:[#allocation2 + $0x58] sm:$0xff]
          %v835 = vsel %vm771, %v823, 0.0
          %v836 = vsel %vm771, %v824, 0.0
          %v837 = vadd.f32 %v835, %v836
          %v838 = vsel %vm771, %v825, 0.0
          %v839 = vadd.f32 %v837, %v838
          %v840 = vsel %vm771, %v826, 0.0
          %v841 = vadd.f32 %v839, %v840
          %v842 = vsel %vm771, %v827, 0.0
          %v843 = vadd.f32 %v841, %v842
          %v844 = vsel %vm771, %v828, 0.0
          %v845 = vadd.f32 %v843, %v844
          %v846 = vsel %vm771, %v829, 0.0
          %v847 = vadd.f32 %v845, %v846
          %v848 = vsel %vm771, %v830, 0.0
          %v849 = vadd.f32 %v847, %v848
          %v850 = vsel %vm771, %v831, 0.0
          %v851 = vadd.f32 %v849, %v850
          %v852 = vsel %vm771, %v832, 0.0
          %v853 = vadd.f32 %v851, %v852
          %v854 = vsel %vm771, %v833, 0.0
          %v855 = vadd.f32 %v853, %v854
          %v856 = vsel %vm771, %v834, 0.0
          %v857 = vadd.f32 %v855, %v856
          %858 = vadd.xlane.f32.xlu0 %v857
          %v859 = vpop.xlane.xlu0 %858
          %v860 = vrot.slane %v859, 4
          %v861 = vadd.f32 %v859, %v860
          %v862 = vrot.slane %v861, 2
          %v863 = vadd.f32 %v861, %v862
          %v864 = vrot.slane %v863, 1
          %v865 = vadd.f32 %v863, %v864
          %s866 = vtos %v865
          %v867 = vstv %s866
          %v868 = vadd.f32 %v867, 0.0
          %869 = vst [vmem:[%s320] sm:$0xff] %v868
          %v870 = vld [vmem:[#allocation3] sm:$0xff]
          %v871 = vld [vmem:[#allocation3 + $0x8] sm:$0xff]
          %v872 = vld [vmem:[#allocation3 + $0x10] sm:$0xff]
          %v873 = vld [vmem:[#allocation3 + $0x18] sm:$0xff]
          %v874 = vld [vmem:[#allocation3 + $0x20] sm:$0xff]
          %v875 = vld [vmem:[#allocation3 + $0x28] sm:$0xff]
          %v876 = vld [vmem:[#allocation3 + $0x30] sm:$0xff]
          %v877 = vld [vmem:[#allocation3 + $0x38] sm:$0xff]
          %v878 = vld [vmem:[#allocation3 + $0x40] sm:$0xff]
          %v879 = vld [vmem:[#allocation3 + $0x48] sm:$0xff]
          %v880 = vld [vmem:[#allocation3 + $0x50] sm:$0xff]
          %v881 = vld [vmem:[#allocation3 + $0x58] sm:$0xff]
          %v882 = vsel %vm771, %v870, 0.0
          %v883 = vsel %vm771, %v871, 0.0
          %v884 = vadd.f32 %v882, %v883
          %v885 = vsel %vm771, %v872, 0.0
          %v886 = vadd.f32 %v884, %v885
          %v887 = vsel %vm771, %v873, 0.0
          %v888 = vadd.f32 %v886, %v887
          %v889 = vsel %vm771, %v874, 0.0
          %v890 = vadd.f32 %v888, %v889
          %v891 = vsel %vm771, %v875, 0.0
          %v892 = vadd.f32 %v890, %v891
          %v893 = vsel %vm771, %v876, 0.0
          %v894 = vadd.f32 %v892, %v893
          %v895 = vsel %vm771, %v877, 0.0
          %v896 = vadd.f32 %v894, %v895
          %v897 = vsel %vm771, %v878, 0.0
          %v898 = vadd.f32 %v896, %v897
          %v899 = vsel %vm771, %v879, 0.0
          %v900 = vadd.f32 %v898, %v899
          %v901 = vsel %vm771, %v880, 0.0
          %v902 = vadd.f32 %v900, %v901
          %v903 = vsel %vm771, %v881, 0.0
          %v904 = vadd.f32 %v902, %v903
          %905 = vadd.xlane.f32.xlu0 %v904
          %v906 = vpop.xlane.xlu0 %905
          %v907 = vrot.slane %v906, 4
          %v908 = vadd.f32 %v906, %v907
          %v909 = vrot.slane %v908, 2
          %v910 = vadd.f32 %v908, %v909
          %v911 = vrot.slane %v910, 1
          %v912 = vadd.f32 %v910, %v911
          %s913 = vtos %v912
          %v914 = vstv %s913
          %v915 = vadd.f32 %v914, 0.0
          %916 = vst [vmem:[%s327] sm:$0xff] %v915
        $region40: #{tpu_custom_call.1} parent=31 // pred_fallthru
          _
        %s917 = sand.u32 %s138, 1
        %s918 = scalar_lea.sflag [#allocation5], %s917
        %s919 = sand.u32 %s138, 1
        %s920 = smul.addr %s919, 8
        %s921 = scalar_lea.vmem [#allocation4], %s920
        %s922 = sand.u32 %s164, 1
        %s923 = scalar_lea.sflag [#allocation7], %s922
        %s924 = sand.u32 %s164, 1
        %s925 = smul.addr %s924, 8
        %s926 = scalar_lea.vmem [#allocation6], %s925
        // Predicated region
        $region41: #{tpu_custom_call.1} parent=31 // pred_check
          %p927 = pneg %p148
        $region42: #{tpu_custom_call.1} parent=31 // pred_check_branch
          %929 = sbr.rel (%p927) target = $region44
        $region43: #{tpu_custom_call.1} parent=31 // pred_region
          %931 = vsyncadd %s918, 0
          %s932 = smul.addr %s26, 8
          %s933 = scalar_lea.hbm %s3, %s932
          %s935 = sshll.u32 %s921, 4
          %s936 = int_to_ptr.vmem [resolvable:$true] %s935
          %s937 = sshll.u32 %s933, 4
          %s938 = int_to_ptr.hbm [resolvable:$true] %s937
          %940 = dma.vmem_to_hbm [thread:$0]  %s936, 128, %s938, %s918
        $region44: #{tpu_custom_call.1} parent=31 // pred_fallthru
          _
        // Predicated region
        $region45: #{tpu_custom_call.1} parent=31 // pred_check
          %p941 = pneg %p174
        $region46: #{tpu_custom_call.1} parent=31 // pred_check_branch
          %943 = sbr.rel (%p941) target = $region48
        $region47: #{tpu_custom_call.1} parent=31 // pred_region
          %945 = vsyncadd %s923, 0
          %s946 = smul.addr %s26, 8
          %s947 = scalar_lea.hbm %s4, %s946
          %s949 = sshll.u32 %s926, 4
          %s950 = int_to_ptr.vmem [resolvable:$true] %s949
          %s951 = sshll.u32 %s947, 4
          %s952 = int_to_ptr.hbm [resolvable:$true] %s951
          %954 = dma.vmem_to_hbm [thread:$0]  %s950, 128, %s952, %s923
        $region48: #{tpu_custom_call.1} parent=31 // pred_fallthru
          _
      $region32: #{tpu_custom_call.1} parent=5 // pred_fallthru
        _
      %p955 = scmp.le.s32.totalorder 2, %s17
      // Predicated region
      $region49: #{tpu_custom_call.1} parent=5 // pred_check
        %p956 = pneg %p955
      $region50: #{tpu_custom_call.1} parent=5 // pred_check_branch
        %958 = sbr.rel (%p956) target = $region52
      $region51: #{tpu_custom_call.1} parent=5 // pred_region
        %s959 = ssub.s32 %s17, 2
        // Predicated region
        $region53: #{tpu_custom_call.1} parent=51 // pred_check
          %p960 = pneg %p154
        $region54: #{tpu_custom_call.1} parent=51 // pred_check_branch
          %962 = sbr.rel (%p960) target = $region56
        $region55: #{tpu_custom_call.1} parent=51 // pred_region
          %s963 = sand.u32 %s139, 1
          %s964 = scalar_lea.sflag [#allocation5], %s963
          %s965 = sand.u32 %s139, 1
          %s966 = smul.addr %s965, 8
          %s967 = scalar_lea.vmem [#allocation4], %s966
          %969 = dma.done %s964, 128
        $region56: #{tpu_custom_call.1} parent=51 // pred_fallthru
          _
        // Predicated region
        $region57: #{tpu_custom_call.1} parent=51 // pred_check
          %p970 = pneg %p180
        $region58: #{tpu_custom_call.1} parent=51 // pred_check_branch
          %972 = sbr.rel (%p970) target = $region60
        $region59: #{tpu_custom_call.1} parent=51 // pred_region
          %s973 = sand.u32 %s165, 1
          %s974 = scalar_lea.sflag [#allocation7], %s973
          %s975 = sand.u32 %s165, 1
          %s976 = smul.addr %s975, 8
          %s977 = scalar_lea.vmem [#allocation6], %s976
          %979 = dma.done %s974, 128
        $region60: #{tpu_custom_call.1} parent=51 // pred_fallthru
          _
      $region52: #{tpu_custom_call.1} parent=5 // pred_fallthru
        _
    $region6: #{tpu_custom_call.1} parent=1 // loop_footer
      %s21 = sadd.s32 1, %s17
    $region7: #{tpu_custom_call.1} parent=1 // loop_footer_branch
      %16 = sbr.rel target = $region3
    $region8: #{tpu_custom_call.1} parent=1 // loop_exit
      _
    %980 = vsyncpa [#allocation5], 1
    %s981 = scalar_lea.sflag [#allocation5], 1
    %982 = vsyncpa %s981, 1
    %983 = vsyncpa [#allocation7], 1
    %s984 = scalar_lea.sflag [#allocation7], 1
    %985 = vsyncpa %s984, 1

</llo_original>
